<compile_context>
chip_gen: v7x
topology: tpu7x:2x2x1
jax: 0.10.0
libtpu: 0.0.40
codegen_flags: <defaults>
</compile_context>

<pallas_src>
import math
import jax
import jax.numpy as jnp
from jax.experimental import pallas as pl
from jax.experimental.pallas import tpu as pltpu


# ---------------------------------------------------------------------------
# Generation-aware resource budgets (v5e/v6e: 128 MiB VMEM, v7x: 64 MiB per TC).
# ---------------------------------------------------------------------------
def _vmem_capacity_bytes():
    try:
        info = pltpu.get_tpu_info()
        cap = getattr(info, "vmem_capacity_bytes", None)
        if cap:
            return int(cap)
    except Exception:
        pass
    return 64 * 1024 * 1024  # conservative default (v7x per-TensorCore VMEM)


_VMEM_CAP = _vmem_capacity_bytes()
_VMEM_LIMIT = min(_VMEM_CAP * 3 // 4, 96 * 1024 * 1024)
_TM_CAP = 512 if _VMEM_CAP >= 100 * 1024 * 1024 else 256  # bigger row tiles on v5e/v6e
_RES_DTYPE = jnp.bfloat16  # residual stream dtype (f32 accumulation inside kernels)
_LN_EPS = 1e-12            # HF ViT layer_norm_eps


# ---------------------------- Pallas kernels ----------------------------

def _make_linear_kernel(*, has_ln, gelu, has_res, has_out_ln, out_dtype):
    """Fused (LN?) -> matmul(bf16, f32 acc) -> +bias -> (GELU?) -> (+res?) -> (LN?)."""

    def kernel(*refs):
        idx = 0
        x_ref = refs[idx]; idx += 1
        w_ref = refs[idx]; idx += 1
        b_ref = refs[idx]; idx += 1
        if has_ln:
            g_ref, bt_ref = refs[idx], refs[idx + 1]; idx += 2
        if has_res:
            r_ref = refs[idx]; idx += 1
        if has_out_ln:
            og_ref, ob_ref = refs[idx], refs[idx + 1]; idx += 2
        o_ref, acc_ref = refs[idx], refs[idx + 1]

        k = pl.program_id(1)

        @pl.when(k == 0)
        def _init():
            acc_ref[...] = jnp.zeros_like(acc_ref)

        x = x_ref[...]
        if has_ln:
            xf = x.astype(jnp.float32)
            mean = jnp.mean(xf, axis=-1, keepdims=True)
            var = jnp.mean(jnp.square(xf - mean), axis=-1, keepdims=True)
            xf = (xf - mean) * jax.lax.rsqrt(var + _LN_EPS)
            xf = xf * g_ref[...] + bt_ref[...]
            xm = xf.astype(jnp.bfloat16)
        else:
            xm = x.astype(jnp.bfloat16)

        acc_ref[...] += jnp.dot(xm, w_ref[...].astype(jnp.bfloat16),
                                preferred_element_type=jnp.float32)

        @pl.when(k == pl.num_programs(1) - 1)
        def _finalize():
            y = acc_ref[...] + b_ref[...].astype(jnp.float32)
            if gelu:
                # TODO(synk): HF ViT default act is exact (erf) GELU; tanh approx used.
                y = jax.nn.gelu(y, approximate=True)
            if has_res:
                y = y + r_ref[...].astype(jnp.float32)
            if has_out_ln:
                mean = jnp.mean(y, axis=-1, keepdims=True)
                var = jnp.mean(jnp.square(y - mean), axis=-1, keepdims=True)
                y = (y - mean) * jax.lax.rsqrt(var + _LN_EPS) * og_ref[...] + ob_ref[...]
            o_ref[...] = y.astype(out_dtype)

    return kernel


def _make_attention_kernel(*, heads, dh):
    """Per-batch multi-head attention from the natural [S, 3*D] QKV layout.

    ctx_ref block: [1, S, D]   (bf16, each head stored directly into its lane slice)
    cls_ref block: [1, 1, S]   (f32, exact head-mean of the CLS query row)
    Note: 1/sqrt(dh) is folded into the Q projection weights at init.
    """
    D = heads * dh

    def kernel(qkv_ref, ctx_ref, cls_ref):
        qkv = qkv_ref[0]                          # [S, 3D] bf16
        S = qkv.shape[0]
        cls_acc = jnp.zeros((1, S), jnp.float32)
        # TODO(synk): per-head contraction width dh underutilizes the 256-wide MXU on
        # v6e/v7x; a head grid axis would also feed v7x's second TensorCore.
        for h in range(heads):
            qh = qkv[:, h * dh:(h + 1) * dh]
            kh = qkv[:, D + h * dh:D + (h + 1) * dh]
            vh = qkv[:, 2 * D + h * dh:2 * D + (h + 1) * dh]
            s = jax.lax.dot_general(qh, kh, (((1,), (1,)), ((), ())),
                                    preferred_element_type=jnp.float32)   # [S, S]
            m = jnp.max(s, axis=-1, keepdims=True)
            e = jnp.exp(s - m)
            denom = jnp.sum(e, axis=-1, keepdims=True)
            # Flash-style: normalize the O(S*dh) context, not the O(S^2) scores.
            inv = pl.reciprocal(denom, approx=True)
            ctx_h = jnp.dot(e.astype(jnp.bfloat16), vh,
                            preferred_element_type=jnp.float32) * inv
            ctx_ref[0, :, h * dh:(h + 1) * dh] = ctx_h.astype(ctx_ref.dtype)
            # Exact normalization for the user-facing CLS attention row.
            cls_acc = cls_acc + e[0:1, :] / denom[0:1, :]
        cls_ref[0] = cls_acc * (1.0 / heads)

    return kernel


# ---------------------------- kernel wrappers ----------------------------

def fused_linear(x, w, b, *, gamma=None, beta=None, residual=None,
                 gelu=False, out_ln=None, out_dtype=jnp.float32):
    """y = out_LN?( GELU?( LN?(x) @ w + b ) + residual? )  with a (rows, K) grid."""
    rows, K = x.shape
    N = w.shape[1]
    has_ln = gamma is not None
    has_res = residual is not None
    has_out_ln = out_ln is not None

    # Row tiling: full-extent block when it fits (exempt from the (8,128) rule, no
    # padding needed); otherwise fixed tile with a ragged last block -- out-of-bounds
    # rows produce garbage results that are simply never written back.
    if rows <= _TM_CAP:
        tm, nm = rows, 1
    else:
        tm, nm = _TM_CAP, pl.cdiv(rows, _TM_CAP)

    # K (reduction) tiling -- single tile unless K is large; LN needs the full row.
    if (K > 2048) and (K % 512 == 0) and not has_ln:
        tk = 512
    else:
        tk = K
    nk = K // tk

    kernel = _make_linear_kernel(has_ln=has_ln, gelu=gelu, has_res=has_res,
                                 has_out_ln=has_out_ln, out_dtype=out_dtype)

    in_specs = [pl.BlockSpec((tm, tk), lambda i, k: (i, k)),
                pl.BlockSpec((tk, N), lambda i, k: (k, 0)),
                pl.BlockSpec((1, N), lambda i, k: (0, 0))]
    inputs = [x, w, b.reshape(1, -1)]
    if has_ln:
        in_specs += [pl.BlockSpec((1, K), lambda i, k: (0, 0)),
                     pl.BlockSpec((1, K), lambda i, k: (0, 0))]
        inputs += [gamma.reshape(1, -1), beta.reshape(1, -1)]
    if has_res:
        in_specs.append(pl.BlockSpec((tm, N), lambda i, k: (i, 0)))
        inputs.append(residual)
    if has_out_ln:
        in_specs += [pl.BlockSpec((1, N), lambda i, k: (0, 0)),
                     pl.BlockSpec((1, N), lambda i, k: (0, 0))]
        inputs += [out_ln[0].reshape(1, -1), out_ln[1].reshape(1, -1)]

    return pl.pallas_call(
        kernel,
        out_shape=jax.ShapeDtypeStruct((rows, N), out_dtype),
        grid_spec=pltpu.PrefetchScalarGridSpec(
            num_scalar_prefetch=0,
            grid=(nm, nk),
            in_specs=in_specs,
            out_specs=pl.BlockSpec((tm, N), lambda i, k: (i, 0)),
            scratch_shapes=[pltpu.VMEM((tm, N), jnp.float32)]),
        compiler_params=pltpu.CompilerParams(
            dimension_semantics=("parallel", "arbitrary"),
            vmem_limit_bytes=_VMEM_LIMIT),
    )(*inputs)


def attention(qkv3, heads):
    """qkv3: [B, S, 3*D] bf16 (natural QKV-linear layout; no per-layer transpose).

    Returns (ctx [B, S, D] bf16, cls_row [B, 1, S] f32 = head-mean CLS attention row).
    """
    B, S, threeD = qkv3.shape
    D = threeD // 3
    dh = D // heads
    kernel = _make_attention_kernel(heads=heads, dh=dh)
    ctx, cls_row = pl.pallas_call(
        kernel,
        out_shape=(jax.ShapeDtypeStruct((B, S, D), jnp.bfloat16),
                   jax.ShapeDtypeStruct((B, 1, S), jnp.float32)),
        grid_spec=pltpu.PrefetchScalarGridSpec(
            num_scalar_prefetch=0,
            grid=(B,),
            in_specs=[pl.BlockSpec((1, S, threeD), lambda b: (b, 0, 0))],
            out_specs=(pl.BlockSpec((1, S, D), lambda b: (b, 0, 0)),
                       pl.BlockSpec((1, 1, S), lambda b: (b, 0, 0)))),
        compiler_params=pltpu.CompilerParams(
            dimension_semantics=("parallel",),
            vmem_limit_bytes=_VMEM_LIMIT),
    )(qkv3)
    return ctx, cls_row


# ---------------------------- synthetic ViT params ----------------------------

def init_vit_params(key, *, channels, patch, hidden, heads, mlp, layers, num_patches):
    ks = jax.random.split(key, 4 + layers)
    scale = 0.02
    dh = hidden // heads
    attn_scale = 1.0 / math.sqrt(dh)

    def nrm(k, shape):
        return scale * jax.random.normal(k, shape, dtype=jnp.float32)

    def w16(k, shape):  # matmul weights pre-packed to bf16 for the MXU
        return nrm(k, shape).astype(jnp.bfloat16)

    params = {
        'patch': patch, 'hidden': hidden, 'heads': heads,
        'patch_w': w16(ks[0], (channels * patch * patch, hidden)),
        'patch_b': jnp.zeros((hidden,), jnp.float32),
        'cls': nrm(ks[1], (1, 1, hidden)),
        'pos': nrm(ks[2], (1, num_patches + 1, hidden)),
        'lnf_g': jnp.ones((hidden,), jnp.float32),
        'lnf_b': jnp.zeros((hidden,), jnp.float32),
        'layers': [],
    }
    for li in range(layers):
        lk = jax.random.split(ks[4 + li], 8)
        # 1/sqrt(dh) attention score scale folded into the Q projection (weight+bias).
        wq = (nrm(lk[0], (hidden, hidden)) * attn_scale).astype(jnp.bfloat16)
        wk = w16(lk[1], (hidden, hidden))
        wv = w16(lk[2], (hidden, hidden))
        params['layers'].append({
            'ln1_g': jnp.ones((hidden,), jnp.float32),
            'ln1_b': jnp.zeros((hidden,), jnp.float32),
            'w_qkv': jnp.concatenate([wq, wk, wv], axis=1),   # [D, 3D]
            'b_qkv': jnp.zeros((3 * hidden,), jnp.float32),   # (Q bias already scaled: 0)
            'wo': w16(lk[3], (hidden, hidden)),
            'bo': jnp.zeros((hidden,), jnp.float32),
            'ln2_g': jnp.ones((hidden,), jnp.float32),
            'ln2_b': jnp.zeros((hidden,), jnp.float32),
            'fc1_w': w16(lk[4], (hidden, mlp)), 'fc1_b': jnp.zeros((mlp,), jnp.float32),
            'fc2_w': w16(lk[5], (mlp, hidden)), 'fc2_b': jnp.zeros((hidden,), jnp.float32),
        })
    return params


# ---------------------------- ImageEncoder.forward ----------------------------

def image_encoder_forward(params, street=None, sat=None):
    """Matches ImageEncoder.forward: uses `street` if given, else `sat`."""
    x = street if street is not None else sat
    B, C, H, W = x.shape
    p = params['patch']
    D = params['hidden']
    heads = params['heads']

    # Patch embedding: Conv2d(kernel=patch, stride=patch) == patch-flatten + matmul.
    # TODO(synk): a real HF Conv2d checkpoint ([D, C, p, p]) must be permuted to the
    # (C, ph, pw)-flattened column order assumed here.
    xp = x.reshape(B, C, H // p, p, W // p, p)
    xp = xp.transpose(0, 2, 4, 1, 3, 5).reshape(B, (H // p) * (W // p), C * p * p)
    npatch = xp.shape[1]
    tok = fused_linear(xp.reshape(B * npatch, C * p * p),
                       params['patch_w'], params['patch_b'],
                       out_dtype=jnp.float32).reshape(B, npatch, D)

    # CLS token + positional embedding (one-time pass, kept in XLA).
    # TODO(synk): could be folded into the patch-embed finalize via the residual path.
    cls = jnp.broadcast_to(params['cls'], (B, 1, D))
    h = jnp.concatenate([cls, tok], axis=1) + params['pos']
    S = npatch + 1
    h2d = h.astype(_RES_DTYPE).reshape(B * S, D)      # residual stream (bf16)

    n_layers = len(params['layers'])
    assert n_layers >= 1
    cls_row = None
    for li, lp in enumerate(params['layers']):
        last = li == n_layers - 1

        # --- attention block (pre-LN): LN1 + fused QKV in one kernel ---
        qkv = fused_linear(h2d, lp['w_qkv'], lp['b_qkv'],
                           gamma=lp['ln1_g'], beta=lp['ln1_b'],
                           out_dtype=jnp.bfloat16)                 # [B*S, 3D]
        ctx, cls_row = attention(qkv.reshape(B, S, 3 * D), heads)  # no transpose
        # out-projection fused with residual add
        h2d = fused_linear(ctx.reshape(B * S, D), lp['wo'], lp['bo'],
                           residual=h2d, out_dtype=_RES_DTYPE)

        # --- MLP block: LN2 + fc1 + GELU fused; fc2 fused with residual add
        #     (+ final LayerNorm fused on the last layer) ---
        mid = fused_linear(h2d, lp['fc1_w'], lp['fc1_b'],
                           gamma=lp['ln2_g'], beta=lp['ln2_b'],
                           gelu=True, out_dtype=jnp.bfloat16)
        if last:
            h2d = fused_linear(mid, lp['fc2_w'], lp['fc2_b'], residual=h2d,
                               out_ln=(params['lnf_g'], params['lnf_b']),
                               out_dtype=jnp.float32)
        else:
            h2d = fused_linear(mid, lp['fc2_w'], lp['fc2_b'], residual=h2d,
                               out_dtype=_RES_DTYPE)

    features = h2d.reshape(B, S, D)                    # last_hidden_state (post-LN)
    # cls_attn = attentions[-1][:, :, 0, :].mean(dim=1)[:, 1:]
    cls_attn = cls_row.reshape(B, S)[:, 1:]
    return features, cls_attn


# ---------------------------- main ----------------------------

if __name__ == "__main__":
    key = jax.random.PRNGKey(0)
    k_img, k_par = jax.random.split(key)

    B, C, H, W = 2, 3, 16, 16          # NCHW image (PyTorch convention)
    patch, hidden, heads, mlp, layers = 8, 32, 4, 64, 2
    num_patches = (H // patch) * (W // patch)

    street = jax.random.normal(k_img, (B, C, H, W), dtype=jnp.float32)
    params = init_vit_params(k_par, channels=C, patch=patch, hidden=hidden,
                             heads=heads, mlp=mlp, layers=layers,
                             num_patches=num_patches)

    features, cls_attn = image_encoder_forward(params, street=street)
    features = jax.block_until_ready(features)
    cls_attn = jax.block_until_ready(cls_attn)

    assert features.shape == (B, num_patches + 1, hidden)
    assert cls_attn.shape == (B, num_patches)
    assert bool(jnp.all(jnp.isfinite(features)))
    assert bool(jnp.all(jnp.isfinite(cls_attn)))
    # CLS attention rows are exactly normalized -> should sum close to the retained mass.
    assert bool(jnp.all(cls_attn >= 0.0))
    print("KERNEL_OK")
</pallas_src>

<mosaic_0001>
module attributes {stable_mosaic.version = 11 : i64} {
  func.func @kernel(%arg0: i32, %arg1: i32, %arg2: memref<8x192xf32, #tpu.memory_space<vmem>>, %arg3: memref<192x32xbf16, #tpu.memory_space<vmem>>, %arg4: memref<1x32xf32, #tpu.memory_space<vmem>>, %arg5: memref<8x32xf32, #tpu.memory_space<vmem>>, %arg6: memref<8x32xf32, #tpu.memory_space<vmem>>) attributes {dimension_semantics = [#tpu.dimension_semantics<parallel>, #tpu.dimension_semantics<arbitrary>], iteration_bounds = array<i64: 1, 1>, scalar_prefetch = 0 : i64, scratch_operands = 1 : i64, tpu.core_type = #tpu.core_type<tc>, window_params = [{transform_indices = @transform_0, window_bounds = array<i64: 8, 192>}, {transform_indices = @transform_1, window_bounds = array<i64: 192, 32>}, {pipeline_mode = #tpu.pipeline_mode<synchronous>, transform_indices = @transform_2, window_bounds = array<i64: 1, 32>}, {transform_indices = @transform_3, window_bounds = array<i64: 8, 32>}]} {
    %c0_i32 = arith.constant 0 : i32
    %0 = arith.cmpi eq, %arg1, %c0_i32 : i32
    %1 = arith.extui %0 : i1 to i32
    %c0_i32_0 = arith.constant 0 : i32
    %2 = arith.cmpi ne, %1, %c0_i32_0 : i32
    scf.if %2 {
      %cst_10 = arith.constant 0.000000e+00 : f32
      %13 = vector.broadcast %cst_10 : f32 to vector<8x32xf32>
      %c0_11 = arith.constant 0 : index
      %c0_12 = arith.constant 0 : index
      %14 = vector.load %arg6[%c0_11, %c0_12] : memref<8x32xf32, #tpu.memory_space<vmem>>, vector<8x32xf32>
      tpu.vector_store %arg6[%c0_11, %c0_12], %13 {strides = array<i32>} : memref<8x32xf32, #tpu.memory_space<vmem>>, vector<8x32xf32>,
    } else {
    }
    %c0 = arith.constant 0 : index
    %c0_1 = arith.constant 0 : index
    %3 = vector.load %arg2[%c0, %c0_1] : memref<8x192xf32, #tpu.memory_space<vmem>>, vector<8x192xf32>
    %4 = arith.truncf %3 : vector<8x192xf32> to vector<8x192xbf16>
    %c0_2 = arith.constant 0 : index
    %c0_3 = arith.constant 0 : index
    %5 = vector.load %arg6[%c0_2, %c0_3] : memref<8x32xf32, #tpu.memory_space<vmem>>, vector<8x32xf32>
    %c0_4 = arith.constant 0 : index
    %c0_5 = arith.constant 0 : index
    %6 = vector.load %arg3[%c0_4, %c0_5] : memref<192x32xbf16, #tpu.memory_space<vmem>>, vector<192x32xbf16>
    %cst = arith.constant dense<0.000000e+00> : vector<8x32xf32>
    %7 = tpu.matmul %4, %6, %cst {dimension_numbers = #tpu.dot_dimension_numbers<[1], [0], [0], [1], [0, 0, 1, 1], [], []>} : vector<8x192xbf16>, vector<192x32xbf16>, vector<8x32xf32> -> vector<8x32xf32>
    %8 = arith.addf %5, %7 : vector<8x32xf32>
    %c0_6 = arith.constant 0 : index
    %c0_7 = arith.constant 0 : index
    %9 = vector.load %arg6[%c0_6, %c0_7] : memref<8x32xf32, #tpu.memory_space<vmem>>, vector<8x32xf32>
    tpu.vector_store %arg6[%c0_6, %c0_7], %8 {strides = array<i32>} : memref<8x32xf32, #tpu.memory_space<vmem>>, vector<8x32xf32>,
    %c0_i32_8 = arith.constant 0 : i32
    %10 = arith.cmpi eq, %arg1, %c0_i32_8 : i32
    %11 = arith.extui %10 : i1 to i32
    %c0_i32_9 = arith.constant 0 : i32
    %12 = arith.cmpi ne, %11, %c0_i32_9 : i32
    scf.if %12 {
      %c0_10 = arith.constant 0 : index
      %c0_11 = arith.constant 0 : index
      %13 = vector.load %arg6[%c0_10, %c0_11] : memref<8x32xf32, #tpu.memory_space<vmem>>, vector<8x32xf32>
      %c0_12 = arith.constant 0 : index
      %c0_13 = arith.constant 0 : index
      %14 = vector.load %arg4[%c0_12, %c0_13] : memref<1x32xf32, #tpu.memory_space<vmem>>, vector<1x32xf32>
      %15 = vector.broadcast %14 : vector<1x32xf32> to vector<8x32xf32>
      %16 = arith.addf %13, %15 : vector<8x32xf32>
      %c0_14 = arith.constant 0 : index
      %c0_15 = arith.constant 0 : index
      %17 = vector.load %arg5[%c0_14, %c0_15] : memref<8x32xf32, #tpu.memory_space<vmem>>, vector<8x32xf32>
      tpu.vector_store %arg5[%c0_14, %c0_15], %16 {strides = array<i32>} : memref<8x32xf32, #tpu.memory_space<vmem>>, vector<8x32xf32>,
    } else {
    }
    return
  }
  func.func @transform_0(%arg0: i32, %arg1: i32) -> (i32, i32) {
    %c0_i32 = arith.constant 0 : i32
    return %arg0, %arg1 : i32, i32
  }
  func.func @transform_1(%arg0: i32, %arg1: i32) -> (i32, i32) {
    %c0_i32 = arith.constant 0 : i32
    %c0_i32_0 = arith.constant 0 : i32
    return %arg1, %c0_i32 : i32, i32
  }
  func.func @transform_2(%arg0: i32, %arg1: i32) -> (i32, i32) {
    %c0_i32 = arith.constant 0 : i32
    %c0_i32_0 = arith.constant 0 : i32
    %c0_i32_1 = arith.constant 0 : i32
    return %c0_i32, %c0_i32_0 : i32, i32
  }
  func.func @transform_3(%arg0: i32, %arg1: i32) -> (i32, i32) {
    %c0_i32 = arith.constant 0 : i32
    %c0_i32_0 = arith.constant 0 : i32
    return %arg0, %c0_i32 : i32, i32
  }
}

</mosaic_0001>

<llo_original>
// kernel: tpu_custom_call.1
$region0: #{tpu_custom_call.1}
  #allocation0 [shape = 'u32[]', space=smem, size = 0x4, offset = 0x4, fixed_abs, tag = 'smem constant byte address 0x4 - core index']
  #allocation1 [shape = 'u32[144,128]{1,0:T(1,128)}', space=vmem, size = 0x12000, scoped, tag = 'internal scratch']
  #allocation2 [shape = 'f32[8,32]{1,0:T(8,128)}', space=vmem, size = 0x1000, scoped, tag = 'scratch operand']
  %s0 = inlined_call_operand.vmem [shape: f32[8,192], index: 0, kind: input, shape index: {}]
  %s1 = inlined_call_operand.vmem [shape: bf16[192,32], index: 1, kind: input, shape index: {}]
  %s2 = inlined_call_operand.vmem [shape: f32[1,32], index: 2, kind: input, shape index: {}]
  %s3 = inlined_call_operand.hbm [shape: f32[8,32], index: 3, kind: output, shape index: {}]
  %s4 = sld [smem:[#allocation0]]
  $region30: #{tpu_custom_call.1} parent=0
    _
  %s6 = ssub.s32 1, %s4
  %s7 = scalar_select 0, %s6, %s4
  $region1: #{tpu_custom_call.1} parent=0
    #allocation3 [shape = 'u8[4096]{0}', space=vmem, size = 0x1000, scoped, tag = 'output window, operand 0, single buffered']
    #allocation4 [shape = 's32[1]{0}', space=sflag, size = 0x4, scoped, tag = 'scoped memory for tpu_custom_call.1']
    %8 = vsyncpa [#allocation4], 0
    // Predicated region
    $region2: #{tpu_custom_call.1} parent=1 // pred_check
      _
    $region3: #{tpu_custom_call.1} parent=1 // pred_check_branch
      %10 = sbr.rel (0) target = $region5
    $region4: #{tpu_custom_call.1} parent=1 // pred_region
      _
    $region5: #{tpu_custom_call.1} parent=1 // pred_fallthru
      _
    // Predicated region
    $region6: #{tpu_custom_call.1} parent=1 // pred_check
      _
    $region7: #{tpu_custom_call.1} parent=1 // pred_check_branch
      %12 = sbr.rel (0) target = $region9
    $region8: #{tpu_custom_call.1} parent=1 // pred_region
      _
    $region9: #{tpu_custom_call.1} parent=1 // pred_fallthru
      _
    // Predicated region
    $region10: #{tpu_custom_call.1} parent=1 // pred_check
      _
    $region11: #{tpu_custom_call.1} parent=1 // pred_check_branch
      %14 = sbr.rel (0) target = $region13
    $region12: #{tpu_custom_call.1} parent=1 // pred_region
      _
    $region13: #{tpu_custom_call.1} parent=1 // pred_fallthru
      _
    %p16 = scmp.eq.s32.totalorder 0, 0
    // Predicated region
    $region14: #{tpu_custom_call.1} parent=1 // pred_check
      %p17 = pneg %p16
    $region15: #{tpu_custom_call.1} parent=1 // pred_check_branch
      %19 = sbr.rel (%p17) target = $region17
    $region16: #{tpu_custom_call.1} parent=1 // pred_region
      %vm20 = vcmask 261120
      %21 = vst.msk [vmem:[#allocation2] sm:$0xff] %vm20, 0.0
    $region17: #{tpu_custom_call.1} parent=1 // pred_fallthru
      _
    %v22 = vld [vmem:[%s0] sm:$0xff]
    %v23 = vld [vmem:[%s0 + $0x8] sm:$0xff]
    %v24 = vpack.c.bf16 %v22, %v22
    %v25 = vpack.c.bf16 %v23, %v23
    %v26 = vld [vmem:[#allocation2] sm:$0xff]
    %v27 = vld [vmem:[%s1] sm:$0xf]
    %v28 = vld [vmem:[%s1 + $0x4] sm:$0xf]
    %v29 = vld [vmem:[%s1 + $0x8] sm:$0xf]
    %v30 = vld [vmem:[%s1 + $0xc] sm:$0xf]
    %v31 = vld [vmem:[%s1 + $0x10] sm:$0xf]
    %v32 = vld [vmem:[%s1 + $0x14] sm:$0xf]
    %v33 = vld [vmem:[%s1 + $0x18] sm:$0xf]
    %v34 = vld [vmem:[%s1 + $0x1c] sm:$0xf]
    %v35 = vld [vmem:[%s1 + $0x20] sm:$0xf]
    %v36 = vld [vmem:[%s1 + $0x24] sm:$0xf]
    %v37 = vld [vmem:[%s1 + $0x28] sm:$0xf]
    %v38 = vld [vmem:[%s1 + $0x2c] sm:$0xf]
    %v39 = vld [vmem:[%s1 + $0x30] sm:$0xf]
    %v40 = vld [vmem:[%s1 + $0x34] sm:$0xf]
    %v41 = vld [vmem:[%s1 + $0x38] sm:$0xf]
    %v42 = vld [vmem:[%s1 + $0x3c] sm:$0xf]
    %v43 = vld [vmem:[%s1 + $0x40] sm:$0xf]
    %v44 = vld [vmem:[%s1 + $0x44] sm:$0xf]
    %v45 = vld [vmem:[%s1 + $0x48] sm:$0xf]
    %v46 = vld [vmem:[%s1 + $0x4c] sm:$0xf]
    %v47 = vld [vmem:[%s1 + $0x50] sm:$0xf]
    %v48 = vld [vmem:[%s1 + $0x54] sm:$0xf]
    %v49 = vld [vmem:[%s1 + $0x58] sm:$0xf]
    %v50 = vld [vmem:[%s1 + $0x5c] sm:$0xf]
    %v75 = vunpack.c.l.b16 %v27
    %v76 = vunpack.c.l.b16 %v28
    %v77 = vunpack.c.l.b16 %v29
    %v78 = vunpack.c.l.b16 %v30
    %v79 = vunpack.c.l.b16 %v31
    %v80 = vunpack.c.l.b16 %v32
    %v81 = vunpack.c.l.b16 %v33
    %v82 = vunpack.c.l.b16 %v34
    %v83 = vunpack.c.l.b16 %v35
    %v84 = vunpack.c.l.b16 %v36
    %v85 = vunpack.c.l.b16 %v37
    %v86 = vunpack.c.l.b16 %v38
    %v87 = vunpack.c.l.b16 %v39
    %v88 = vunpack.c.l.b16 %v40
    %v89 = vunpack.c.l.b16 %v41
    %v90 = vunpack.c.l.b16 %v42
    %v91 = vunpack.c.l.b16 %v43
    %v92 = vunpack.c.l.b16 %v44
    %v93 = vunpack.c.l.b16 %v45
    %v94 = vunpack.c.l.b16 %v46
    %v95 = vunpack.c.l.b16 %v47
    %v96 = vunpack.c.l.b16 %v48
    %v97 = vunpack.c.l.b16 %v49
    %v98 = vunpack.c.l.b16 %v50
    %v99 = vpack.c.b16 %v76, %v75
    %v100 = vpack.c.b16 %v78, %v77
    %v101 = vpack.c.b16 %v80, %v79
    %v102 = vpack.c.b16 %v82, %v81
    %v103 = vpack.c.b16 %v84, %v83
    %v104 = vpack.c.b16 %v86, %v85
    %v105 = vpack.c.b16 %v88, %v87
    %v106 = vpack.c.b16 %v90, %v89
    %v107 = vpack.c.b16 %v92, %v91
    %v108 = vpack.c.b16 %v94, %v93
    %v109 = vpack.c.b16 %v96, %v95
    %v110 = vpack.c.b16 %v98, %v97
    %vm123 = vcmask 523264
    %v125 = vsel %vm123, %v25, 0
    %127 = vmatprep.subr.bf16.mxu0 0
    %128 = vmatpush1.bf16.msra.mxu0 %v99
    %129 = vmatprep.subr.bf16.mxu0 0
    %130 = vmatpush1.bf16.msra.mxu0 %v100
    %131 = vmatprep.subr.bf16.mxu0 0
    %132 = vmatpush1.bf16.msra.mxu0 %v101
    %133 = vmatprep.subr.bf16.mxu0 0
    %134 = vmatpush1.bf16.msra.mxu0 %v102
    %135 = vmatprep.subr.bf16.mxu0 0
    %136 = vmatpush1.bf16.msra.mxu0 %v103
    %137 = vmatprep.subr.bf16.mxu0 0
    %138 = vmatpush1.bf16.msra.mxu0 %v104
    %139 = vmatprep.subr.bf16.mxu0 0
    %140 = vmatpush1.bf16.msra.mxu0 %v105
    %141 = vmatprep.subr.bf16.mxu0 0
    %142 = vmatpush1.bf16.msra.mxu0 %v106
    %143 = vmatprep.subr.bf16.mxu0 0
    %144 = vmatpush1.bf16.msra.mxu0 %v107
    %145 = vmatprep.subr.bf16.mxu0 0
    %146 = vmatpush1.bf16.msra.mxu0 %v108
    %147 = vmatprep.subr.bf16.mxu0 0
    %148 = vmatpush1.bf16.msra.mxu0 %v109
    %149 = vmatprep.subr.bf16.mxu0 0
    %150 = vmatpush1.bf16.msra.mxu0 %v110
    %151 = vmatprep.subr.bf16.mxu0 0
    %152 = vmatpush1.bf16.msra.mxu0 0
    %153 = vmatprep.subr.bf16.mxu0 0
    %154 = vmatpush1.bf16.msra.mxu0 0
    %155 = vmatprep.subr.bf16.mxu0 0
    %156 = vmatpush1.bf16.msra.mxu0 0
    %157 = vmatprep.subr.bf16.mxu0 0
    %158 = vmatpush1.bf16.msra.mxu0 0
    %159 = vmatprep.mubr.bf16.mxu0 %v125
    %160 = vmatmul.mubr.bf16.gmra.mrb[0].mxu0 %v24
    %v161 = vpop.f32.mrb[0].mxu0
    %v162 = vadd.f32 0.0, %v161
    %v163 = vpop.f32.mrb[0].mxu0
    %v164 = vpop.f32.mrb[0].mxu0
    %v165 = vpop.f32.mrb[0].mxu0
    %166 = vdwg.mxu0
    %v167 = vadd.f32 %v26, %v162
    %vm168 = vcmask 261120
    %169 = vst.msk [vmem:[#allocation2] sm:$0xff] %vm168, %v167
    // Predicated region
    $region18: #{tpu_custom_call.1} parent=1 // pred_check
      %p170 = pneg %p16
    $region19: #{tpu_custom_call.1} parent=1 // pred_check_branch
      %172 = sbr.rel (%p170) target = $region21
    $region20: #{tpu_custom_call.1} parent=1 // pred_region
      %v173 = vld [vmem:[#allocation2] sm:$0xff]
      %v174 = vld [vmem:[%s2] sm:$0x1]
      %v176 = vlaneseq
      %v177 = vshrl.u32 %v176, 7
      %v178 = vsub.s32 0, %v177
      %v179 = vrot.slane %v174, %v178
      %v181 = vadd.f32 %v173, %v179
      %182 = vst.msk [vmem:[#allocation3] sm:$0xff] %vm168, %v181
    $region21: #{tpu_custom_call.1} parent=1 // pred_fallthru
      _
    // Predicated region
    $region22: #{tpu_custom_call.1} parent=1 // pred_check
      _
    $region23: #{tpu_custom_call.1} parent=1 // pred_check_branch
      %184 = sbr.rel (0) target = $region25
    $region24: #{tpu_custom_call.1} parent=1 // pred_region
      %s186 = ssub.s32 128, 128
      %187 = vsyncadd [#allocation4], %s186
      %s189 = sshll.u32 [#allocation3], 4
      %s190 = int_to_ptr.vmem [resolvable:$true] %s189
      %192 = dma.vmem_to_hbm [thread:$0]  %s190, 128, %s3, [#allocation4]
    $region25: #{tpu_custom_call.1} parent=1 // pred_fallthru
      _
    // Predicated region
    $region26: #{tpu_custom_call.1} parent=1 // pred_check
      _
    $region27: #{tpu_custom_call.1} parent=1 // pred_check_branch
      %194 = sbr.rel (0) target = $region29
    $region28: #{tpu_custom_call.1} parent=1 // pred_region
      %195 = dma.done [#allocation4], 128
    $region29: #{tpu_custom_call.1} parent=1 // pred_fallthru
      _
    %196 = vsyncpa [#allocation4], 1

</llo_original>
